<compile_context>
chip_gen: v7x
topology: tpu7x:2x2x1
jax: 0.10.0
libtpu: 0.0.40
codegen_flags: <defaults>
</compile_context>

<pallas_src>
import functools

import jax
import jax.numpy as jnp
from jax.experimental import pallas as pl
from jax.experimental.pallas import tpu as pltpu

_SMOOTH = 1.0


def _dice_partial_kernel(p_ref, t_ref, out_ref, inter_acc, sum_acc, *,
                         bn, hw_tile, n_total, hw, nrb, bps,
                         ragged_rows, phantom_blocks, ragged_cols):
    """Streams channel-0 (bn, hw_tile) blocks; per-split VMEM accumulators."""
    s = pl.program_id(0)   # parallel split (v7x: one per TensorCore)
    i = pl.program_id(1)   # row block within split
    j = pl.program_id(2)   # column (flattened-H*W) block

    @pl.when((i == 0) & (j == 0))
    def _():
        inter_acc[...] = jnp.zeros_like(inter_acc)
        sum_acc[...] = jnp.zeros_like(sum_acc)

    p = p_ref[...].astype(jnp.float32)   # (bn, hw_tile)
    t = t_ref[...].astype(jnp.float32)

    def accumulate(pv, tv):
        # Leading-axis reduce: VPU adds + one sublane reduce (idle XLU slot).
        inter_acc[...] += jnp.sum(pv * tv, axis=0, keepdims=True)
        sum_acc[...] += jnp.sum(pv + tv, axis=0, keepdims=True)

    needs_mask = ragged_rows or phantom_blocks or ragged_cols
    if not needs_mask:
        accumulate(p, t)
    else:
        rb = s * bps + i   # un-clamped global row-block index
        conds = []
        if ragged_rows or phantom_blocks:
            first_masked_rb = (nrb - 1) if ragged_rows else nrb
            conds.append(rb >= first_masked_rb)
        if ragged_cols:
            conds.append(j >= pl.num_programs(2) - 1)
        mask_block = functools.reduce(jnp.logical_or, conds)

        # Steady state: unmasked accumulate (mask VALU ops hoisted out).
        @pl.when(jnp.logical_not(mask_block))
        def _():
            accumulate(p, t)

        # Tail blocks only: build the validity mask and zero padding rows/cols.
        @pl.when(mask_block)
        def _():
            valid = None
            if ragged_rows or phantom_blocks:
                row = jax.lax.broadcasted_iota(jnp.int32, p.shape, 0)
                valid = (rb * bn + row) < n_total
            if ragged_cols:
                col = jax.lax.broadcasted_iota(jnp.int32, p.shape, 1)
                cmask = (j * hw_tile + col) < hw
                valid = cmask if valid is None else (valid & cmask)
            accumulate(jnp.where(valid, p, 0.0), jnp.where(valid, t, 0.0))

    @pl.when((i == pl.num_programs(1) - 1) & (j == pl.num_programs(2) - 1))
    def _():
        # One cross-lane reduce per split; dice arithmetic done in the wrapper.
        out_ref[0, 0] = jnp.sum(inter_acc[...])
        out_ref[0, 1] = jnp.sum(sum_acc[...])


def dice_loss(y_pred, y_true):
    assert y_pred.shape == y_true.shape
    assert y_pred.ndim == 4, "expected NCHW inputs"
    n, c, h, w = y_pred.shape
    hw = h * w
    row_len = c * hw
    itemsize = max(jnp.dtype(y_pred.dtype).itemsize,
                   jnp.dtype(y_true.dtype).itemsize)

    # --- per-generation VMEM budget -------------------------------------
    try:
        vmem_cap = int(pltpu.get_tpu_info().vmem_capacity_bytes)
    except Exception:
        vmem_cap = 64 * 1024 * 1024          # conservative (v7x-sized) fallback
    vmem_limit = min(vmem_cap * 3 // 4, 96 * 1024 * 1024)
    block_budget = min(8 * 1024 * 1024, vmem_limit // 8)

    # --- lane-dense tiling of the flattened (N, C*H*W) view --------------
    # hw_tile is the per-block lane extent inside channel 0's columns.
    lane_cap = max(128, block_budget // (8 * itemsize))
    if hw % 128 == 0:
        m = hw // 128
        k_max = min(m, lane_cap // 128)
        k = max(kk for kk in range(1, k_max + 1) if m % kk == 0)
        hw_tile = 128 * k                    # 128-multiple divisor of H*W
    elif row_len <= lane_cap:
        # Fallback for non-128-aligned H*W: take the whole row (all channels,
        # it's the full last dim so always layout-legal) and mask cols >= H*W.
        hw_tile = row_len
    else:
        hw_tile = 128 * (lane_cap // 128)    # ragged last column block, masked
    ragged_cols = (hw % hw_tile) != 0
    ncb = pl.cdiv(hw, hw_tile)

    # Row-block size: fill the block budget, keep the sublane dim legal
    # (multiple of 8, or the full batch).
    bn = block_budget // (hw_tile * itemsize)
    if bn >= n:
        bn = n
    else:
        bn = max(8, (bn // 8) * 8)
    nrb = pl.cdiv(n, bn)
    ragged_rows = (n % bn) != 0

    # Leading "parallel" axis: split the row blocks across (up to) 2 cores.
    n_split = min(2, nrb)
    bps = pl.cdiv(nrb, n_split)
    phantom_blocks = (bps * n_split) > nrb   # duplicate blocks, fully masked

    grid = (n_split, bps, ncb)

    def in_index(s, i, j):
        rb = jnp.minimum(s * bps + i, nrb - 1)   # clamp phantom blocks
        return (rb, j)

    in_block = pl.BlockSpec((bn, hw_tile), in_index)

    kernel = functools.partial(
        _dice_partial_kernel, bn=bn, hw_tile=hw_tile, n_total=n, hw=hw,
        nrb=nrb, bps=bps, ragged_rows=ragged_rows,
        phantom_blocks=phantom_blocks, ragged_cols=ragged_cols)

    # Metadata-only reshape for the default row-major layout: channel-0
    # selection stays fused into the BlockSpec DMA (j*hw_tile < hw).
    yp = y_pred.reshape(n, row_len)
    yt = y_true.reshape(n, row_len)

    parts = pl.pallas_call(
        kernel,
        out_shape=jax.ShapeDtypeStruct((n_split, 2), jnp.float32),
        grid_spec=pltpu.PrefetchScalarGridSpec(
            num_scalar_prefetch=0,
            grid=grid,
            in_specs=[in_block, in_block],
            out_specs=pl.BlockSpec((1, 2), lambda s, i, j: (s, 0),
                                   memory_space=pltpu.SMEM),
            scratch_shapes=[
                pltpu.VMEM((1, hw_tile), jnp.float32),  # sum over rows of p*t
                pltpu.VMEM((1, hw_tile), jnp.float32),  # sum over rows of p+t
            ],
        ),
        compiler_params=pltpu.CompilerParams(
            dimension_semantics=("parallel", "arbitrary", "arbitrary"),
            vmem_limit_bytes=int(vmem_limit)),
    )(yp, yt)

    intersection = jnp.sum(parts[:, 0])
    total = jnp.sum(parts[:, 1])
    dsc = (2.0 * intersection + _SMOOTH) / (total + _SMOOTH)
    return 1.0 - dsc


def _dice_loss_ref(y_pred, y_true):
    p = y_pred[:, 0].reshape(-1).astype(jnp.float32)
    t = y_true[:, 0].reshape(-1).astype(jnp.float32)
    inter = jnp.sum(p * t)
    dsc = (2.0 * inter + _SMOOTH) / (jnp.sum(p) + jnp.sum(t) + _SMOOTH)
    return 1.0 - dsc


if __name__ == "__main__":
    key = jax.random.PRNGKey(0)
    k1, k2 = jax.random.split(key)
    # Small shapes consistent with the module: N=2, C=4, H=W=16.
    y_pred = jax.nn.sigmoid(jax.random.normal(k1, (2, 4, 16, 16), jnp.float32))
    y_true = (jax.random.uniform(k2, (2, 4, 16, 16)) > 0.5).astype(jnp.float32)

    loss = jax.block_until_ready(dice_loss(y_pred, y_true))
    ref = jax.block_until_ready(_dice_loss_ref(y_pred, y_true))
    assert jnp.allclose(loss, ref, atol=1e-5, rtol=1e-5), (loss, ref)
    print("KERNEL_OK")
</pallas_src>

<mosaic_0001>
module attributes {stable_mosaic.version = 11 : i64} {
  func.func @_dice_partial_kernel(%arg0: i32, %arg1: i32, %arg2: i32, %arg3: memref<2x256xf32, #tpu.memory_space<vmem>>, %arg4: memref<2x256xf32, #tpu.memory_space<vmem>>, %arg5: memref<1x2xf32, #tpu.memory_space<smem>>, %arg6: memref<1x256xf32, #tpu.memory_space<vmem>>, %arg7: memref<1x256xf32, #tpu.memory_space<vmem>>) attributes {dimension_semantics = [#tpu.dimension_semantics<parallel>, #tpu.dimension_semantics<arbitrary>, #tpu.dimension_semantics<arbitrary>], iteration_bounds = array<i64: 1, 1, 1>, scalar_prefetch = 0 : i64, scratch_operands = 2 : i64, tpu.core_type = #tpu.core_type<tc>, window_params = [{transform_indices = @transform_0, window_bounds = array<i64: 2, 256>}, {transform_indices = @transform_1, window_bounds = array<i64: 2, 256>}, {transform_indices = @transform_2, window_bounds = array<i64: 1, 2>}]} {
    %c0_i32 = arith.constant 0 : i32
    %0 = arith.cmpi eq, %arg1, %c0_i32 : i32
    %c0_i32_0 = arith.constant 0 : i32
    %1 = arith.cmpi eq, %arg2, %c0_i32_0 : i32
    %2 = arith.andi %0, %1 : i1
    %3 = arith.extui %2 : i1 to i32
    %c0_i32_1 = arith.constant 0 : i32
    %4 = arith.cmpi ne, %3, %c0_i32_1 : i32
    scf.if %4 {
      %cst_17 = arith.constant 0.000000e+00 : f32
      %24 = vector.broadcast %cst_17 : f32 to vector<1x256xf32>
      %c0_18 = arith.constant 0 : index
      %c0_19 = arith.constant 0 : index
      %25 = vector.load %arg6[%c0_18, %c0_19] : memref<1x256xf32, #tpu.memory_space<vmem>>, vector<1x256xf32>
      tpu.vector_store %arg6[%c0_18, %c0_19], %24 {strides = array<i32>} : memref<1x256xf32, #tpu.memory_space<vmem>>, vector<1x256xf32>,
      %cst_20 = arith.constant 0.000000e+00 : f32
      %26 = vector.broadcast %cst_20 : f32 to vector<1x256xf32>
      %c0_21 = arith.constant 0 : index
      %c0_22 = arith.constant 0 : index
      %27 = vector.load %arg7[%c0_21, %c0_22] : memref<1x256xf32, #tpu.memory_space<vmem>>, vector<1x256xf32>
      tpu.vector_store %arg7[%c0_21, %c0_22], %26 {strides = array<i32>} : memref<1x256xf32, #tpu.memory_space<vmem>>, vector<1x256xf32>,
    } else {
    }
    %c0 = arith.constant 0 : index
    %c0_2 = arith.constant 0 : index
    %5 = vector.load %arg3[%c0, %c0_2] : memref<2x256xf32, #tpu.memory_space<vmem>>, vector<2x256xf32>
    %c0_3 = arith.constant 0 : index
    %c0_4 = arith.constant 0 : index
    %6 = vector.load %arg4[%c0_3, %c0_4] : memref<2x256xf32, #tpu.memory_space<vmem>>, vector<2x256xf32>
    %c0_5 = arith.constant 0 : index
    %c0_6 = arith.constant 0 : index
    %7 = vector.load %arg6[%c0_5, %c0_6] : memref<1x256xf32, #tpu.memory_space<vmem>>, vector<1x256xf32>
    %8 = arith.mulf %5, %6 : vector<2x256xf32>
    %cst = arith.constant dense<0.000000e+00> : vector<256xf32>
    %9 = vector.multi_reduction <add>, %8, %cst [0] : vector<2x256xf32> to vector<256xf32>
    %10 = vector.shape_cast %9 : vector<256xf32> to vector<1x256xf32>
    %11 = arith.addf %7, %10 : vector<1x256xf32>
    %c0_7 = arith.constant 0 : index
    %c0_8 = arith.constant 0 : index
    %12 = vector.load %arg6[%c0_7, %c0_8] : memref<1x256xf32, #tpu.memory_space<vmem>>, vector<1x256xf32>
    tpu.vector_store %arg6[%c0_7, %c0_8], %11 {strides = array<i32>} : memref<1x256xf32, #tpu.memory_space<vmem>>, vector<1x256xf32>,
    %c0_9 = arith.constant 0 : index
    %c0_10 = arith.constant 0 : index
    %13 = vector.load %arg7[%c0_9, %c0_10] : memref<1x256xf32, #tpu.memory_space<vmem>>, vector<1x256xf32>
    %14 = arith.addf %5, %6 : vector<2x256xf32>
    %cst_11 = arith.constant dense<0.000000e+00> : vector<256xf32>
    %15 = vector.multi_reduction <add>, %14, %cst_11 [0] : vector<2x256xf32> to vector<256xf32>
    %16 = vector.shape_cast %15 : vector<256xf32> to vector<1x256xf32>
    %17 = arith.addf %13, %16 : vector<1x256xf32>
    %c0_12 = arith.constant 0 : index
    %c0_13 = arith.constant 0 : index
    %18 = vector.load %arg7[%c0_12, %c0_13] : memref<1x256xf32, #tpu.memory_space<vmem>>, vector<1x256xf32>
    tpu.vector_store %arg7[%c0_12, %c0_13], %17 {strides = array<i32>} : memref<1x256xf32, #tpu.memory_space<vmem>>, vector<1x256xf32>,
    %c0_i32_14 = arith.constant 0 : i32
    %19 = arith.cmpi eq, %arg1, %c0_i32_14 : i32
    %c0_i32_15 = arith.constant 0 : i32
    %20 = arith.cmpi eq, %arg2, %c0_i32_15 : i32
    %21 = arith.andi %19, %20 : i1
    %22 = arith.extui %21 : i1 to i32
    %c0_i32_16 = arith.constant 0 : i32
    %23 = arith.cmpi ne, %22, %c0_i32_16 : i32
    scf.if %23 {
      %c0_17 = arith.constant 0 : index
      %c0_18 = arith.constant 0 : index
      %24 = vector.load %arg6[%c0_17, %c0_18] : memref<1x256xf32, #tpu.memory_space<vmem>>, vector<1x256xf32>
      %25 = vector.shape_cast %24 : vector<1x256xf32> to vector<1x1x256xf32>
      %cst_19 = arith.constant dense<0.000000e+00> : vector<1xf32>
      %26 = vector.multi_reduction <add>, %25, %cst_19 [1, 2] : vector<1x1x256xf32> to vector<1xf32>
      %27 = vector.shape_cast %26 : vector<1xf32> to vector<1x1x1xf32>
      %28 = vector.extract %27[0, 0, 0] : f32 from vector<1x1x1xf32>
      %c0_20 = arith.constant 0 : index
      %c0_21 = arith.constant 0 : index
      %29 = memref.load %arg5[%c0_20, %c0_21] : memref<1x2xf32, #tpu.memory_space<smem>>
      memref.store %28, %arg5[%c0_20, %c0_21] : memref<1x2xf32, #tpu.memory_space<smem>>
      %c0_22 = arith.constant 0 : index
      %c0_23 = arith.constant 0 : index
      %30 = vector.load %arg7[%c0_22, %c0_23] : memref<1x256xf32, #tpu.memory_space<vmem>>, vector<1x256xf32>
      %31 = vector.shape_cast %30 : vector<1x256xf32> to vector<1x1x256xf32>
      %cst_24 = arith.constant dense<0.000000e+00> : vector<1xf32>
      %32 = vector.multi_reduction <add>, %31, %cst_24 [1, 2] : vector<1x1x256xf32> to vector<1xf32>
      %33 = vector.shape_cast %32 : vector<1xf32> to vector<1x1x1xf32>
      %34 = vector.extract %33[0, 0, 0] : f32 from vector<1x1x1xf32>
      %c0_25 = arith.constant 0 : index
      %c1 = arith.constant 1 : index
      %35 = memref.load %arg5[%c0_25, %c1] : memref<1x2xf32, #tpu.memory_space<smem>>
      memref.store %34, %arg5[%c0_25, %c1] : memref<1x2xf32, #tpu.memory_space<smem>>
    } else {
    }
    return
  }
  func.func @transform_0(%arg0: i32, %arg1: i32, %arg2: i32) -> (i32, i32) {
    %c1_i32 = arith.constant 1 : i32
    %0 = arith.muli %arg0, %c1_i32 : i32
    %1 = arith.addi %0, %arg1 : i32
    %c0_i32 = arith.constant 0 : i32
    %2 = arith.minsi %1, %c0_i32 : i32
    %c0_i32_0 = arith.constant 0 : i32
    return %2, %arg2 : i32, i32
  }
  func.func @transform_1(%arg0: i32, %arg1: i32, %arg2: i32) -> (i32, i32) {
    %c1_i32 = arith.constant 1 : i32
    %0 = arith.muli %arg0, %c1_i32 : i32
    %1 = arith.addi %0, %arg1 : i32
    %c0_i32 = arith.constant 0 : i32
    %2 = arith.minsi %1, %c0_i32 : i32
    %c0_i32_0 = arith.constant 0 : i32
    return %2, %arg2 : i32, i32
  }
  func.func @transform_2(%arg0: i32, %arg1: i32, %arg2: i32) -> (i32, i32) {
    %c0_i32 = arith.constant 0 : i32
    %c0_i32_0 = arith.constant 0 : i32
    return %arg0, %c0_i32 : i32, i32
  }
}

</mosaic_0001>

<llo_original>
// kernel: tpu_custom_call.1
$region0: #{tpu_custom_call.1}
  #allocation0 [shape = 'u32[]', space=smem, size = 0x4, offset = 0x4, fixed_abs, tag = 'smem constant byte address 0x4 - core index']
  #allocation1 [shape = 'u32[144,128]{1,0:T(1,128)}', space=vmem, size = 0x12000, scoped, tag = 'internal scratch']
  #allocation2 [shape = 'f32[1,256]{1,0:T(1,128)}', space=vmem, size = 0x400, scoped, tag = 'scratch operand']
  #allocation3 [shape = 'f32[1,256]{1,0:T(1,128)}', space=vmem, size = 0x400, scoped, tag = 'scratch operand']
  %s0 = inlined_call_operand.hbm [shape: f32[2,1024], index: 0, kind: input, shape index: {}]
  %s1 = inlined_call_operand.hbm [shape: f32[2,1024], index: 1, kind: input, shape index: {}]
  %s2 = inlined_call_operand.hbm [shape: f32[1,2], index: 2, kind: output, shape index: {}]
  %s3 = sld [smem:[#allocation0]]
  $region34: #{tpu_custom_call.1} parent=0
    _
  %s5 = ssub.s32 1, %s3
  %s6 = scalar_select 0, %s5, %s3
  $region1: #{tpu_custom_call.1} parent=0
    #allocation4 [shape = 'u8[2048]{0}', space=vmem, size = 0x800, scoped, tag = 'input window, operand 0, single buffered']
    #allocation5 [shape = 's32[1]{0}', space=sflag, size = 0x4, scoped, tag = 'scoped memory for tpu_custom_call.1']
    #allocation6 [shape = 's32[1]{0}', space=sflag, size = 0x4, scoped, tag = 'scoped memory for tpu_custom_call.1']
    #allocation7 [shape = 'u8[2048]{0}', space=vmem, size = 0x800, scoped, tag = 'input window, operand 1, single buffered']
    #allocation8 [shape = 's32[1]{0}', space=sflag, size = 0x4, scoped, tag = 'scoped memory for tpu_custom_call.1']
    #allocation9 [shape = 'u8[512]{0}', space=smem, size = 0x200, scoped, tag = 'output window, operand 0, single buffered']
    %7 = vsyncpa [#allocation5], 0
    %8 = vsyncpa [#allocation8], 0
    %9 = vsyncpa [#allocation6], 0
    // Predicated region
    $region2: #{tpu_custom_call.1} parent=1 // pred_check
      _
    $region3: #{tpu_custom_call.1} parent=1 // pred_check_branch
      %11 = sbr.rel (0) target = $region5
    $region4: #{tpu_custom_call.1} parent=1 // pred_region
      %s12 = sadd.s32 0, 0
      %p13 = scmp.lt.s32.totalorder %s12, 0
      %s14 = scalar_select %p13, %s12, 0
      %s16 = ssub.s32 64, 64
      %17 = vsyncadd [#allocation5], %s16
      %s18 = smul.addr %s14, 8
      %s19 = smul.addr %s18, 32
      %s20 = scalar_lea.hbm %s0, %s19
      %s22 = sshll.u32 [#allocation4], 4
      %s23 = int_to_ptr.vmem [resolvable:$true] %s22
      %25 = dma.hbm_to_vmem [thread:$0]  %s20, 64, %s23, [#allocation5]
    $region5: #{tpu_custom_call.1} parent=1 // pred_fallthru
      _
    // Predicated region
    $region6: #{tpu_custom_call.1} parent=1 // pred_check
      _
    $region7: #{tpu_custom_call.1} parent=1 // pred_check_branch
      %27 = sbr.rel (0) target = $region9
    $region8: #{tpu_custom_call.1} parent=1 // pred_region
      %s28 = sadd.s32 0, 0
      %p29 = scmp.lt.s32.totalorder %s28, 0
      %s30 = scalar_select %p29, %s28, 0
      %s32 = ssub.s32 64, 64
      %33 = vsyncadd [#allocation8], %s32
      %s34 = smul.addr %s30, 8
      %s35 = smul.addr %s34, 32
      %s36 = scalar_lea.hbm %s1, %s35
      %s38 = sshll.u32 [#allocation7], 4
      %s39 = int_to_ptr.vmem [resolvable:$true] %s38
      %41 = dma.hbm_to_vmem [thread:$0]  %s36, 64, %s39, [#allocation8]
    $region9: #{tpu_custom_call.1} parent=1 // pred_fallthru
      _
    // Predicated region
    $region10: #{tpu_custom_call.1} parent=1 // pred_check
      _
    $region11: #{tpu_custom_call.1} parent=1 // pred_check_branch
      %43 = sbr.rel (0) target = $region13
    $region12: #{tpu_custom_call.1} parent=1 // pred_region
      %44 = dma.done [#allocation5], 64
    $region13: #{tpu_custom_call.1} parent=1 // pred_fallthru
      _
    // Predicated region
    $region14: #{tpu_custom_call.1} parent=1 // pred_check
      _
    $region15: #{tpu_custom_call.1} parent=1 // pred_check_branch
      %46 = sbr.rel (0) target = $region17
    $region16: #{tpu_custom_call.1} parent=1 // pred_region
      %47 = dma.done [#allocation8], 64
    $region17: #{tpu_custom_call.1} parent=1 // pred_fallthru
      _
    %s48 = sadd.s32 0, 0
    %p49 = scmp.lt.s32.totalorder %s48, 0
    %s50 = scalar_select %p49, %s48, 0
    %s51 = sadd.s32 0, 0
    %p52 = scmp.lt.s32.totalorder %s51, 0
    %s53 = scalar_select %p52, %s51, 0
    %p54 = scmp.eq.s32.totalorder 0, 0
    %p55 = scmp.eq.s32.totalorder 0, 0
    %p56 = pnand %p54, %p55
    %p57 = pneg %p56
    // Predicated region
    $region18: #{tpu_custom_call.1} parent=1 // pred_check
      _
    $region19: #{tpu_custom_call.1} parent=1 // pred_check_branch
      %59 = sbr.rel (%p56) target = $region21
    $region20: #{tpu_custom_call.1} parent=1 // pred_region
      %v60 = vlaneseq
      %vm61 = vcmp.ge.s32.totalorder %v60, 0
      %vm62 = vcmp.lt.s32.totalorder %v60, 256
      %vm63 = vmand %vm61, %vm62
      %64 = vst.msk [vmem:[#allocation2] sm:$0x3] %vm63, 0.0
      %65 = vst.msk [vmem:[#allocation3] sm:$0x3] %vm63, 0.0
    $region21: #{tpu_custom_call.1} parent=1 // pred_fallthru
      _
    %v66 = vld [vmem:[#allocation4] sm:$0xf]
    %v67 = vld [vmem:[#allocation7] sm:$0xf]
    %v68 = vld [vmem:[#allocation2] sm:$0x3]
    %v69 = vmul.f32 %v66, %v67
    %v72 = vunpack.c.l.s4 1983009808
    %v73 = vunpack.c.0.s8 %v72
    %v74 = vlaneseq
    %v75 = vshrl.u32 %v74, 7
    %v76 = vsub.s32 %v73, %v75
    %v77 = vrot.slane %v69, %v76
    %v78 = vcombine.high %v77, %v77
    %vm81 = vcmask 1041408
    %v82 = vsel %vm81, %v77, 0.0
    %v83 = vrot.slane %v82, 4
    %v84 = vadd.f32 %v82, %v83
    %v85 = vrot.slane %v84, 2
    %v86 = vadd.f32 %v84, %v85
    %v87 = vrot.slane %v86, 1
    %v88 = vadd.f32 %v86, %v87
    %v89 = vsel %vm81, %v78, 0.0
    %v90 = vrot.slane %v89, 4
    %v91 = vadd.f32 %v89, %v90
    %v92 = vrot.slane %v91, 2
    %v93 = vadd.f32 %v91, %v92
    %v94 = vrot.slane %v93, 1
    %v95 = vadd.f32 %v93, %v94
    %v98 = vcombine.low %v88, %v95
    %v100 = vunpack.c.l.s4 1966171168
    %v101 = vunpack.c.0.s8 %v100
    %v102 = vlaneseq
    %v103 = vshrl.u32 %v102, 7
    %v104 = vsub.s32 %v101, %v103
    %v105 = vrot.slane %v98, %v104
    %v107 = vunpack.c.l.s4 1966171168
    %v108 = vunpack.c.0.s8 %v107
    %v109 = vlaneseq
    %v110 = vshrl.u32 %v109, 7
    %v111 = vsub.s32 %v108, %v110
    %v112 = vrot.slane %v105, %v111
    %v114 = vadd.f32 %v68, %v112
    %v115 = vlaneseq
    %vm116 = vcmp.ge.s32.totalorder %v115, 0
    %vm117 = vcmp.lt.s32.totalorder %v115, 256
    %vm118 = vmand %vm116, %vm117
    %119 = vst.msk [vmem:[#allocation2] sm:$0x3] %vm118, %v114
    %v120 = vld [vmem:[#allocation3] sm:$0x3]
    %v121 = vadd.f32 %v66, %v67
    %v124 = vunpack.c.l.s4 1983009808
    %v125 = vunpack.c.0.s8 %v124
    %v126 = vlaneseq
    %v127 = vshrl.u32 %v126, 7
    %v128 = vsub.s32 %v125, %v127
    %v129 = vrot.slane %v121, %v128
    %v130 = vcombine.high %v129, %v129
    %v133 = vsel %vm81, %v129, 0.0
    %v134 = vrot.slane %v133, 4
    %v135 = vadd.f32 %v133, %v134
    %v136 = vrot.slane %v135, 2
    %v137 = vadd.f32 %v135, %v136
    %v138 = vrot.slane %v137, 1
    %v139 = vadd.f32 %v137, %v138
    %v140 = vsel %vm81, %v130, 0.0
    %v141 = vrot.slane %v140, 4
    %v142 = vadd.f32 %v140, %v141
    %v143 = vrot.slane %v142, 2
    %v144 = vadd.f32 %v142, %v143
    %v145 = vrot.slane %v144, 1
    %v146 = vadd.f32 %v144, %v145
    %v149 = vcombine.low %v139, %v146
    %v151 = vunpack.c.l.s4 1966171168
    %v152 = vunpack.c.0.s8 %v151
    %v153 = vlaneseq
    %v154 = vshrl.u32 %v153, 7
    %v155 = vsub.s32 %v152, %v154
    %v156 = vrot.slane %v149, %v155
    %v158 = vunpack.c.l.s4 1966171168
    %v159 = vunpack.c.0.s8 %v158
    %v160 = vlaneseq
    %v161 = vshrl.u32 %v160, 7
    %v162 = vsub.s32 %v159, %v161
    %v163 = vrot.slane %v156, %v162
    %v165 = vadd.f32 %v120, %v163
    %166 = vst.msk [vmem:[#allocation3] sm:$0x3] %vm118, %v165
    // Predicated region
    $region22: #{tpu_custom_call.1} parent=1 // pred_check
      _
    $region23: #{tpu_custom_call.1} parent=1 // pred_check_branch
      %168 = sbr.rel (%p56) target = $region25
    $region24: #{tpu_custom_call.1} parent=1 // pred_region
      %v169 = vld [vmem:[#allocation2] sm:$0x3]
      %v171 = vlaneseq
      %v172 = vshrl.u32 %v171, 7
      %v173 = vsub.s32 0, %v172
      %v174 = vrot.slane %v169, %v173
      %v175 = vlaneseq
      %v176 = vshrl.u32 %v175, 7
      %v177 = vsub.s32 1, %v176
      %v178 = vrot.slane %v169, %v177
      %vm181 = vcmask 1040384
      %v182 = vsel %vm181, %v174, 0.0
      %v183 = vsel %vm181, %v178, 0.0
      %v184 = vadd.f32 %v182, %v183
      %185 = vadd.xlane.f32.xlu0 %v184
      %v186 = vpop.xlane.xlu0 %185
      %v187 = vrot.slane %v186, 4
      %v188 = vadd.f32 %v186, %v187
      %v189 = vrot.slane %v188, 2
      %v190 = vadd.f32 %v188, %v189
      %v191 = vrot.slane %v190, 1
      %v192 = vadd.f32 %v190, %v191
      %s193 = vtos %v192
      %s194 = scalar_lea.smem [#allocation9], 0
      %195 = sst [smem:[%s194]] %s193
      %v196 = vld [vmem:[#allocation3] sm:$0x3]
      %v198 = vlaneseq
      %v199 = vshrl.u32 %v198, 7
      %v200 = vsub.s32 0, %v199
      %v201 = vrot.slane %v196, %v200
      %v202 = vlaneseq
      %v203 = vshrl.u32 %v202, 7
      %v204 = vsub.s32 1, %v203
      %v205 = vrot.slane %v196, %v204
      %v208 = vsel %vm181, %v201, 0.0
      %v209 = vsel %vm181, %v205, 0.0
      %v210 = vadd.f32 %v208, %v209
      %211 = vadd.xlane.f32.xlu0 %v210
      %v212 = vpop.xlane.xlu0 %211
      %v213 = vrot.slane %v212, 4
      %v214 = vadd.f32 %v212, %v213
      %v215 = vrot.slane %v214, 2
      %v216 = vadd.f32 %v214, %v215
      %v217 = vrot.slane %v216, 1
      %v218 = vadd.f32 %v216, %v217
      %s219 = vtos %v218
      %s220 = scalar_lea.smem [#allocation9], 1
      %221 = sst [smem:[%s220]] %s219
    $region25: #{tpu_custom_call.1} parent=1 // pred_fallthru
      _
    // Predicated region
    $region26: #{tpu_custom_call.1} parent=1 // pred_check
      _
    $region27: #{tpu_custom_call.1} parent=1 // pred_check_branch
      %223 = sbr.rel (0) target = $region29
    $region28: #{tpu_custom_call.1} parent=1 // pred_region
      %s225 = ssub.s32 16, 16
      %226 = vsyncadd [#allocation6], %s225
      %229 = dma.smem_to_hbm [#allocation9], 16, %s2, [#allocation6]
    $region29: #{tpu_custom_call.1} parent=1 // pred_fallthru
      _
    // Predicated region
    $region30: #{tpu_custom_call.1} parent=1 // pred_check
      _
    $region31: #{tpu_custom_call.1} parent=1 // pred_check_branch
      %231 = sbr.rel (0) target = $region33
    $region32: #{tpu_custom_call.1} parent=1 // pred_region
      %232 = dma.done [#allocation6], 16
    $region33: #{tpu_custom_call.1} parent=1 // pred_fallthru
      _
    %233 = sfence
    %234 = vsyncpa [#allocation5], 1
    %235 = vsyncpa [#allocation8], 1
    %236 = vsyncpa [#allocation6], 1

</llo_original>
